<compile_context>
chip_gen: v5e
topology: v5e:2x2
jax: 0.10.0
libtpu: 0.0.40
codegen_flags: <defaults>
</compile_context>

<pallas_src>
import jax
import jax.numpy as jnp
from jax.experimental import pallas as pl
from jax.experimental.pallas import tpu as pltpu


def _round_up(x, m):
    return ((x + m - 1) // m) * m


# -----------------------------------------------------------------------------
# Phase 1: hoisted input projection   gx[t, b, :] = x[t, b, :] @ Wx + bias
# -----------------------------------------------------------------------------
def _xproj_kernel(x_ref, wx_ref, b_ref, gx_ref):
    gx_ref[...] = (
        jnp.dot(x_ref[...], wx_ref[...], preferred_element_type=jnp.float32)
        + b_ref[...]
    )


# -----------------------------------------------------------------------------
# Phase 2: serial recurrence, streaming pre-activation tiles
# -----------------------------------------------------------------------------
def _make_recurrent_kernel(t_chunk, t_valid, hp):
    Hp = hp
    rem = t_valid % t_chunk  # number of valid timesteps in the (possibly padded) last chunk

    def kernel(gx_ref, wh_ref, wp_ref, bp_ref, out_ref, h_ref, c_ref):
        ti = pl.program_id(1)

        # (Re)initialize the carried state at the start of each batch block.
        @pl.when(ti == 0)
        def _():
            h_ref[...] = jnp.zeros_like(h_ref)
            c_ref[...] = jnp.zeros_like(c_ref)

        wh = wh_ref[...]            # (Hp, 4Hp) bf16, single-buffered, grid-invariant
        h = h_ref[...]              # (BB, Hp) f32
        c = c_ref[...]              # (BB, Hp) f32

        # Statically unrolled short recurrence over this time chunk.
        for t in range(t_chunk):
            gates = gx_ref[t] + jnp.dot(
                h.astype(wh.dtype), wh, preferred_element_type=jnp.float32
            )                                        # (BB, 4Hp) f32
            g = jnp.tanh(gates[:, :Hp])              # lane-aligned gate slices
            ifo = jax.nn.sigmoid(gates[:, Hp:])      # fused i/f/o sigmoid
            i = ifo[:, :Hp]
            f = ifo[:, Hp:2 * Hp]
            o = ifo[:, 2 * Hp:]
            c_new = g * i + c * f
            h_new = jnp.tanh(c_new) * o
            if rem and t >= rem:
                # This step index only carries real data in non-last chunks.
                valid = ti < pl.num_programs(1) - 1
                c = jnp.where(valid, c_new, c)
                h = jnp.where(valid, h_new, h)
            else:
                c = c_new
                h = h_new

        h_ref[...] = h
        c_ref[...] = c

        # Final projection (lane-dense C_pad), only after the last time chunk.
        @pl.when(ti == pl.num_programs(1) - 1)
        def _():
            out_ref[...] = (
                jnp.dot(h.astype(wp_ref.dtype), wp_ref[...],
                        preferred_element_type=jnp.float32)
                + bp_ref[...]
            )

    return kernel


# -----------------------------------------------------------------------------
# One-time weight packing (kept out of the forward path)
# -----------------------------------------------------------------------------
def pack_lstm_params(params, compute_dtype=jnp.bfloat16):
    (W_gx, W_gh, b_g,
     W_ix, W_ih, b_i,
     W_fx, W_fh, b_f,
     W_ox, W_oh, b_o,
     W_ph, b_p) = params

    H, D = W_gx.shape
    C = W_ph.shape[0]
    Hp = _round_up(H, 128)          # lane-aligned gate blocks
    C_pad = _round_up(C, 128)       # lane-dense output projection

    # Fused gate weights, gate order [g, i, f, o]; each gate owns an Hp-wide,
    # lane-aligned column block.  Padded rows/cols are zero, which keeps the
    # padded hidden lanes exactly zero throughout the recurrence.
    wx = jnp.zeros((D, 4 * Hp), compute_dtype)
    wh = jnp.zeros((Hp, 4 * Hp), compute_dtype)
    b = jnp.zeros((1, 4 * Hp), jnp.float32)
    gates = [(W_gx, W_gh, b_g), (W_ix, W_ih, b_i), (W_fx, W_fh, b_f), (W_ox, W_oh, b_o)]
    for gi, (Wxg, Whg, bg) in enumerate(gates):
        col = gi * Hp
        wx = wx.at[:, col:col + H].set(Wxg.T.astype(compute_dtype))
        wh = wh.at[:H, col:col + H].set(Whg.T.astype(compute_dtype))
        b = b.at[0, col:col + H].set(bg.astype(jnp.float32))

    wp = jnp.zeros((Hp, C_pad), compute_dtype).at[:H, :C].set(
        W_ph.T.astype(compute_dtype))
    bp = jnp.zeros((1, C_pad), jnp.float32).at[0, :C].set(b_p.astype(jnp.float32))

    return dict(wx=wx, wh=wh, b=b, wp=wp, bp=bp, H=H, Hp=Hp, C=C, C_pad=C_pad, D=D)


# -----------------------------------------------------------------------------
# Forward pass
# -----------------------------------------------------------------------------
def lstm_forward(x, packed):
    """x: (B, T, D) float32. Returns p: (B, num_classes) float32."""
    B, T, D = x.shape
    Hp, C, C_pad = packed["Hp"], packed["C"], packed["C_pad"]
    wdt = packed["wx"].dtype
    w_bytes = jnp.dtype(wdt).itemsize

    # ---- block sizes: explicit, not gcd-degraded -----------------------------
    TC = 8                                   # timesteps per grid step (tail masked)
    T_pad = _round_up(T, TC)
    B_pad = _round_up(B, 8)
    BB = min(B_pad, 256)                     # target batch block
    if B_pad % BB:
        B_pad = _round_up(B_pad, BB)
    # v7x megacore: keep >= 2 batch blocks when the batch is large enough so the
    # "parallel" axis can be sharded across both TensorCores.
    if B_pad // BB == 1 and B_pad >= 256 and (B_pad // 2) % 8 == 0:
        BB = B_pad // 2

    # ---- generation-aware VMEM budget ----------------------------------------
    try:
        info = pltpu.get_tpu_info()
        vmem_cap = int(getattr(info, "vmem_capacity_bytes", 64 * 1024 * 1024))
    except Exception:
        vmem_cap = 64 * 1024 * 1024
    vmem_budget = max(vmem_cap - 12 * 1024 * 1024, 32 * 1024 * 1024)  # headroom

    def _rec_footprint(bb):
        return (
            2 * TC * bb * 4 * Hp * 4          # streamed pre-activation tiles (f32, 2 bufs)
            + Hp * 4 * Hp * w_bytes           # Wh (single-buffered)
            + Hp * C_pad * w_bytes            # Wp (single-buffered)
            + 8 * C_pad * 4                   # bp
            + 2 * bb * C_pad * 4              # output block
            + 2 * bb * Hp * 4                 # h / c scratch
        )

    # Shrink the batch block (keeping divisibility) if the resident footprint
    # would not fit the per-generation budget.
    while (_rec_footprint(BB) > vmem_budget and BB >= 32
           and (BB // 2) % 8 == 0 and B_pad % (BB // 2) == 0):
        BB = BB // 2
    est_rec = _rec_footprint(BB)
    assert est_rec <= vmem_budget, (
        f"resident VMEM footprint {est_rec} B exceeds budget {vmem_budget} B; "
        "Wh needs N-axis tiling for this hidden size")
    # TODO(synk): tile Wh along the 4H (N) axis with an inner per-timestep loop
    # when a resident Wh no longer fits v7x's 64 MiB VMEM.

    # ---- glue: time-major layout + padding (fold into data producer in real use)
    x_tbd = jnp.transpose(x, (1, 0, 2)).astype(wdt)          # (T, B, D)
    x_tbd = jnp.pad(x_tbd, ((0, T_pad - T), (0, B_pad - B), (0, 0)))

    # ---- Phase 1: one big gate pre-activation GEMM ---------------------------
    M = T_pad * B_pad
    TM = 512 if M % 512 == 0 else 256 if M % 256 == 0 else 128 if M % 128 == 0 else 64
    x2d = x_tbd.reshape(M, D)

    est_proj = (
        2 * TM * max(D, 128) * w_bytes
        + max(D, 8) * 4 * Hp * w_bytes
        + 8 * 4 * Hp * 4
        + 2 * TM * 4 * Hp * 4
    )
    vmem_limit = int(min(vmem_budget,
                         max(2 * max(est_rec, est_proj), 32 * 1024 * 1024)))

    gx2d = pl.pallas_call(
        _xproj_kernel,
        out_shape=jax.ShapeDtypeStruct((M, 4 * Hp), jnp.float32),
        grid_spec=pltpu.PrefetchScalarGridSpec(
            num_scalar_prefetch=0,
            grid=(M // TM,),
            in_specs=[
                pl.BlockSpec((TM, D), lambda m: (m, 0)),
                pl.BlockSpec((D, 4 * Hp), lambda m: (0, 0),
                             pipeline_mode=pl.Buffered(1)),
                pl.BlockSpec((1, 4 * Hp), lambda m: (0, 0),
                             pipeline_mode=pl.Buffered(1)),
            ],
            out_specs=pl.BlockSpec((TM, 4 * Hp), lambda m: (m, 0)),
        ),
        compiler_params=pltpu.CompilerParams(
            dimension_semantics=("parallel",),
            vmem_limit_bytes=vmem_limit,
        ),
    )(x2d, packed["wx"], packed["b"])
    gx = gx2d.reshape(T_pad, B_pad, 4 * Hp)                  # (T_pad, B_pad, 4Hp) f32

    # ---- Phase 2: serial recurrence ------------------------------------------
    kernel = _make_recurrent_kernel(TC, T, Hp)
    out = pl.pallas_call(
        kernel,
        out_shape=jax.ShapeDtypeStruct((B_pad, C_pad), jnp.float32),
        grid_spec=pltpu.PrefetchScalarGridSpec(
            num_scalar_prefetch=0,
            grid=(B_pad // BB, T_pad // TC),
            in_specs=[
                # Streamed pre-activation tiles.  If an xprof trace shows
                # exposed DMA between time chunks for large H, bump this to
                # pipeline_mode=pl.Buffered(3).
                pl.BlockSpec((TC, BB, 4 * Hp), lambda bi, ti: (ti, bi, 0)),
                pl.BlockSpec((Hp, 4 * Hp), lambda bi, ti: (0, 0),
                             pipeline_mode=pl.Buffered(1)),      # Wh
                pl.BlockSpec((Hp, C_pad), lambda bi, ti: (0, 0),
                             pipeline_mode=pl.Buffered(1)),      # Wp
                pl.BlockSpec((1, C_pad), lambda bi, ti: (0, 0),
                             pipeline_mode=pl.Buffered(1)),      # bp
            ],
            out_specs=pl.BlockSpec((BB, C_pad), lambda bi, ti: (bi, 0)),
            scratch_shapes=[
                pltpu.VMEM((BB, Hp), jnp.float32),   # h carry
                pltpu.VMEM((BB, Hp), jnp.float32),   # c carry
            ],
        ),
        compiler_params=pltpu.CompilerParams(
            dimension_semantics=("parallel", "arbitrary"),
            vmem_limit_bytes=vmem_limit,
        ),
    )(gx, packed["wh"], packed["wp"], packed["bp"])

    return out[:B, :C]


# -----------------------------------------------------------------------------
# Parameter init + pure-JAX reference (matches the PyTorch module)
# -----------------------------------------------------------------------------
def init_params(key, input_dim, num_hidden, num_classes, std=0.001):
    ks = jax.random.split(key, 14)
    H, D, C = num_hidden, input_dim, num_classes
    n = lambda k, shape: std * jax.random.normal(k, shape, dtype=jnp.float32)
    W_gx = n(ks[0], (H, D)); W_gh = n(ks[1], (H, H)); b_g = n(ks[2], (H,))
    W_ix = n(ks[3], (H, D)); W_ih = n(ks[4], (H, H)); b_i = n(ks[5], (H,))
    W_fx = n(ks[6], (H, D)); W_fh = n(ks[7], (H, H)); b_f = n(ks[8], (H,))
    W_ox = n(ks[9], (H, D)); W_oh = n(ks[10], (H, H)); b_o = n(ks[11], (H,))
    W_ph = n(ks[12], (C, H)); b_p = n(ks[13], (C,))
    return (W_gx, W_gh, b_g, W_ix, W_ih, b_i,
            W_fx, W_fh, b_f, W_ox, W_oh, b_o, W_ph, b_p)


def lstm_reference(x, params):
    (W_gx, W_gh, b_g, W_ix, W_ih, b_i, W_fx, W_fh, b_f,
     W_ox, W_oh, b_o, W_ph, b_p) = params
    B, T, D = x.shape
    H = W_gh.shape[0]
    h = jnp.zeros((B, H), jnp.float32)
    c = jnp.zeros((B, H), jnp.float32)
    for t in range(T):
        x_t = x[:, t]
        g = jnp.tanh(x_t @ W_gx.T + h @ W_gh.T + b_g)
        i = jax.nn.sigmoid(x_t @ W_ix.T + h @ W_ih.T + b_i)
        f = jax.nn.sigmoid(x_t @ W_fx.T + h @ W_fh.T + b_f)
        o = jax.nn.sigmoid(x_t @ W_ox.T + h @ W_oh.T + b_o)
        c = g * i + c * f
        h = jnp.tanh(c) * o
    return h @ W_ph.T + b_p


if __name__ == "__main__":
    batch_size, seq_length, input_dim, num_hidden, num_classes = 2, 8, 4, 32, 10

    key = jax.random.PRNGKey(0)
    k_param, k_x = jax.random.split(key)
    params = init_params(k_param, input_dim, num_hidden, num_classes)
    x = jax.random.normal(k_x, (batch_size, seq_length, input_dim), dtype=jnp.float32)

    packed = pack_lstm_params(params)          # one-time weight packing
    p = lstm_forward(x, packed)
    jax.block_until_ready(p)

    assert p.shape == (batch_size, num_classes)
    ref = lstm_reference(x, params)
    # bf16 matmul operands with std=0.001 weights: validate with loose rtol.
    assert jnp.allclose(p, ref, rtol=1e-2, atol=1e-4), float(jnp.max(jnp.abs(p - ref)))
    print("KERNEL_OK")
</pallas_src>

<mosaic_0001>
module attributes {stable_mosaic.version = 11 : i64} {
  func.func @_xproj_kernel(%arg0: i32, %arg1: memref<64x4xbf16, #tpu.memory_space<vmem>>, %arg2: memref<4x512xbf16, #tpu.memory_space<vmem>>, %arg3: memref<1x512xf32, #tpu.memory_space<vmem>>, %arg4: memref<64x512xf32, #tpu.memory_space<vmem>>) attributes {dimension_semantics = [#tpu.dimension_semantics<parallel>], iteration_bounds = array<i64: 1>, scalar_prefetch = 0 : i64, scratch_operands = 0 : i64, tpu.core_type = #tpu.core_type<tc>, window_params = [{transform_indices = @transform_0, window_bounds = array<i64: 64, 4>}, {pipeline_mode = #tpu.pipeline_mode<synchronous>, transform_indices = @transform_1, window_bounds = array<i64: 4, 512>}, {pipeline_mode = #tpu.pipeline_mode<synchronous>, transform_indices = @transform_2, window_bounds = array<i64: 1, 512>}, {transform_indices = @transform_3, window_bounds = array<i64: 64, 512>}]} {
    %c0 = arith.constant 0 : index
    %c0_0 = arith.constant 0 : index
    %0 = vector.load %arg1[%c0, %c0_0] : memref<64x4xbf16, #tpu.memory_space<vmem>>, vector<64x4xbf16>
    %c0_1 = arith.constant 0 : index
    %c0_2 = arith.constant 0 : index
    %1 = vector.load %arg2[%c0_1, %c0_2] : memref<4x512xbf16, #tpu.memory_space<vmem>>, vector<4x512xbf16>
    %cst = arith.constant dense<0.000000e+00> : vector<64x512xf32>
    %2 = tpu.matmul %0, %1, %cst {dimension_numbers = #tpu.dot_dimension_numbers<[1], [0], [0], [1], [0, 0, 1, 1], [], []>} : vector<64x4xbf16>, vector<4x512xbf16>, vector<64x512xf32> -> vector<64x512xf32>
    %c0_3 = arith.constant 0 : index
    %c0_4 = arith.constant 0 : index
    %3 = vector.load %arg3[%c0_3, %c0_4] : memref<1x512xf32, #tpu.memory_space<vmem>>, vector<1x512xf32>
    %4 = vector.broadcast %3 : vector<1x512xf32> to vector<64x512xf32>
    %5 = arith.addf %2, %4 : vector<64x512xf32>
    %c0_5 = arith.constant 0 : index
    %c0_6 = arith.constant 0 : index
    %6 = vector.load %arg4[%c0_5, %c0_6] : memref<64x512xf32, #tpu.memory_space<vmem>>, vector<64x512xf32>
    tpu.vector_store %arg4[%c0_5, %c0_6], %5 {strides = array<i32>} : memref<64x512xf32, #tpu.memory_space<vmem>>, vector<64x512xf32>,
    return
  }
  func.func @transform_0(%arg0: i32) -> (i32, i32) {
    %c0_i32 = arith.constant 0 : i32
    %c0_i32_0 = arith.constant 0 : i32
    return %arg0, %c0_i32 : i32, i32
  }
  func.func @transform_1(%arg0: i32) -> (i32, i32) {
    %c0_i32 = arith.constant 0 : i32
    %c0_i32_0 = arith.constant 0 : i32
    %c0_i32_1 = arith.constant 0 : i32
    return %c0_i32, %c0_i32_0 : i32, i32
  }
  func.func @transform_2(%arg0: i32) -> (i32, i32) {
    %c0_i32 = arith.constant 0 : i32
    %c0_i32_0 = arith.constant 0 : i32
    %c0_i32_1 = arith.constant 0 : i32
    return %c0_i32, %c0_i32_0 : i32, i32
  }
  func.func @transform_3(%arg0: i32) -> (i32, i32) {
    %c0_i32 = arith.constant 0 : i32
    %c0_i32_0 = arith.constant 0 : i32
    return %arg0, %c0_i32 : i32, i32
  }
}

</mosaic_0001>

<llo_original>
// kernel: tpu_custom_call.1
$region0: #{tpu_custom_call.1}
  #allocation0 [shape = 'u32[]', space=smem, size = 0x4, offset = 0x4, fixed_abs, tag = 'smem constant byte address 0x4 - core index']
  #allocation1 [shape = 'u32[72,128]{1,0:T(1,128)}', space=vmem, size = 0x9000, scoped, tag = 'internal scratch']
  %s0 = inlined_call_operand.vmem [shape: bf16[64,4], index: 0, kind: input, shape index: {}]
  %s1 = inlined_call_operand.vmem [shape: bf16[4,512], index: 1, kind: input, shape index: {}]
  %s2 = inlined_call_operand.vmem [shape: f32[1,512], index: 2, kind: input, shape index: {}]
  %s3 = inlined_call_operand.hbm [shape: f32[64,512], index: 3, kind: output, shape index: {}]
  %s4 = sld [smem:[#allocation0]]
  $region22: #{tpu_custom_call.1} parent=0
    _
  %s6 = ssub.s32 1, %s4
  %s7 = scalar_select 0, %s6, %s4
  $region1: #{tpu_custom_call.1} parent=0
    #allocation2 [shape = 'u8[131072]{0}', space=vmem, size = 0x20000, scoped, tag = 'output window, operand 0, single buffered']
    #allocation3 [shape = 's32[1]{0}', space=sflag, size = 0x4, scoped, tag = 'scoped memory for tpu_custom_call.1']
    %8 = vsyncpa [#allocation3], 0
    // Predicated region
    $region2: #{tpu_custom_call.1} parent=1 // pred_check
      _
    $region3: #{tpu_custom_call.1} parent=1 // pred_check_branch
      %10 = sbr.rel (0) target = $region5
    $region4: #{tpu_custom_call.1} parent=1 // pred_region
      _
    $region5: #{tpu_custom_call.1} parent=1 // pred_fallthru
      _
    // Predicated region
    $region6: #{tpu_custom_call.1} parent=1 // pred_check
      _
    $region7: #{tpu_custom_call.1} parent=1 // pred_check_branch
      %12 = sbr.rel (0) target = $region9
    $region8: #{tpu_custom_call.1} parent=1 // pred_region
      _
    $region9: #{tpu_custom_call.1} parent=1 // pred_fallthru
      _
    // Predicated region
    $region10: #{tpu_custom_call.1} parent=1 // pred_check
      _
    $region11: #{tpu_custom_call.1} parent=1 // pred_check_branch
      %14 = sbr.rel (0) target = $region13
    $region12: #{tpu_custom_call.1} parent=1 // pred_region
      _
    $region13: #{tpu_custom_call.1} parent=1 // pred_fallthru
      _
    %v16 = vld [vmem:[%s0] sm:$0xf]
    %v17 = vld [vmem:[%s0 + $0x4] sm:$0xf]
    %v18 = vld [vmem:[%s0 + $0x8] sm:$0xf]
    %v19 = vld [vmem:[%s0 + $0xc] sm:$0xf]
    %v20 = vld [vmem:[%s0 + $0x10] sm:$0xf]
    %v21 = vld [vmem:[%s0 + $0x14] sm:$0xf]
    %v22 = vld [vmem:[%s0 + $0x18] sm:$0xf]
    %v23 = vld [vmem:[%s0 + $0x1c] sm:$0xf]
    %v24 = vld [vmem:[%s1] sm:$0xff]
    %v25 = vld [vmem:[%s2] sm:$0xf]
    %v27 = vperm.slane %v25, 0
    %v28 = vperm.slane %v25, 1
    %v29 = vperm.slane %v25, 2
    %v30 = vperm.slane %v25, 3
    %v43 = vunpack.c.l.b16 %v16
    %v44 = vunpack.c.l.b16 %v17
    %v45 = vunpack.c.l.b16 %v18
    %v46 = vunpack.c.l.b16 %v19
    %v47 = vunpack.c.l.b16 %v20
    %v48 = vunpack.c.l.b16 %v21
    %v49 = vunpack.c.l.b16 %v22
    %v50 = vunpack.c.l.b16 %v23
    %v51 = vpack.c.b16 %v44, %v43
    %v52 = vpack.c.b16 %v46, %v45
    %v53 = vpack.c.b16 %v48, %v47
    %v54 = vpack.c.b16 %v50, %v49
    %56 = vst [vmem:[#allocation1] ss:$4 sm:$0xff] %v24
    %v57 = vld.sshfl [vmem:[#allocation1] sm:$0xff pattern:$0x73625140]
    %v58 = vld.sshfl [vmem:[#allocation1 + $0x8] sm:$0xff pattern:$0x73625140]
    %v59 = vld.sshfl [vmem:[#allocation1 + $0x10] sm:$0xff pattern:$0x73625140]
    %v60 = vld.sshfl [vmem:[#allocation1 + $0x18] sm:$0xff pattern:$0x73625140]
    %vm61 = vcmask 31744
    %v63 = vsel %vm61, %v51, 0
    %v66 = vsel %vm61, %v52, 0
    %v69 = vsel %vm61, %v53, 0
    %v72 = vsel %vm61, %v54, 0
    %vm74 = vcmask 1041408
    %v75 = vsel %vm74, %v57, 0
    %v77 = vsel %vm74, %v58, 0
    %v79 = vsel %vm74, %v59, 0
    %v81 = vsel %vm74, %v60, 0
    %83 = vmatpush.bf16.msra.mxu0 0
    %84 = vmatpush.bf16.msra.mxu0 0
    %85 = vmatpush.bf16.msra.mxu0 0
    %86 = vmatpush.bf16.msra.mxu0 0
    %87 = vmatpush.bf16.msra.mxu0 0
    %88 = vmatpush.bf16.msra.mxu0 0
    %89 = vmatpush.bf16.msra.mxu0 0
    %90 = vmatpush.bf16.msra.mxu0 %v75
    %91 = vmatmul.bf16.gmra.mxu0 %v63
    %v92 = vpop.f32.mrf.mxu0
    %v93 = vadd.f32 %v27, %v92
    %v94 = vpop.f32.mrf.mxu0
    %v95 = vadd.f32 %v27, %v94
    %96 = vmatmul.bf16.gmra.mxu0 %v66
    %v97 = vpop.f32.mrf.mxu0
    %v98 = vadd.f32 %v27, %v97
    %v99 = vpop.f32.mrf.mxu0
    %v100 = vadd.f32 %v27, %v99
    %101 = vmatmul.bf16.gmra.mxu0 %v69
    %v102 = vpop.f32.mrf.mxu0
    %v103 = vadd.f32 %v27, %v102
    %v104 = vpop.f32.mrf.mxu0
    %v105 = vadd.f32 %v27, %v104
    %106 = vmatmul.bf16.gmra.mxu0 %v72
    %v107 = vpop.f32.mrf.mxu0
    %v108 = vadd.f32 %v27, %v107
    %v109 = vpop.f32.mrf.mxu0
    %v110 = vadd.f32 %v27, %v109
    %111 = vdwg.mxu0
    %112 = vmatpush.bf16.msra.mxu0 0
    %113 = vmatpush.bf16.msra.mxu0 0
    %114 = vmatpush.bf16.msra.mxu0 0
    %115 = vmatpush.bf16.msra.mxu0 0
    %116 = vmatpush.bf16.msra.mxu0 0
    %117 = vmatpush.bf16.msra.mxu0 0
    %118 = vmatpush.bf16.msra.mxu0 0
    %119 = vmatpush.bf16.msra.mxu0 %v77
    %120 = vmatmul.bf16.gmra.mxu0 %v63
    %v121 = vpop.f32.mrf.mxu0
    %v122 = vadd.f32 %v28, %v121
    %v123 = vpop.f32.mrf.mxu0
    %v124 = vadd.f32 %v28, %v123
    %125 = vmatmul.bf16.gmra.mxu0 %v66
    %v126 = vpop.f32.mrf.mxu0
    %v127 = vadd.f32 %v28, %v126
    %v128 = vpop.f32.mrf.mxu0
    %v129 = vadd.f32 %v28, %v128
    %130 = vmatmul.bf16.gmra.mxu0 %v69
    %v131 = vpop.f32.mrf.mxu0
    %v132 = vadd.f32 %v28, %v131
    %v133 = vpop.f32.mrf.mxu0
    %v134 = vadd.f32 %v28, %v133
    %135 = vmatmul.bf16.gmra.mxu0 %v72
    %v136 = vpop.f32.mrf.mxu0
    %v137 = vadd.f32 %v28, %v136
    %v138 = vpop.f32.mrf.mxu0
    %v139 = vadd.f32 %v28, %v138
    %140 = vdwg.mxu0
    %141 = vmatpush.bf16.msra.mxu0 0
    %142 = vmatpush.bf16.msra.mxu0 0
    %143 = vmatpush.bf16.msra.mxu0 0
    %144 = vmatpush.bf16.msra.mxu0 0
    %145 = vmatpush.bf16.msra.mxu0 0
    %146 = vmatpush.bf16.msra.mxu0 0
    %147 = vmatpush.bf16.msra.mxu0 0
    %148 = vmatpush.bf16.msra.mxu0 %v79
    %149 = vmatmul.bf16.gmra.mxu0 %v63
    %v150 = vpop.f32.mrf.mxu0
    %v151 = vadd.f32 %v29, %v150
    %v152 = vpop.f32.mrf.mxu0
    %v153 = vadd.f32 %v29, %v152
    %154 = vmatmul.bf16.gmra.mxu0 %v66
    %v155 = vpop.f32.mrf.mxu0
    %v156 = vadd.f32 %v29, %v155
    %v157 = vpop.f32.mrf.mxu0
    %v158 = vadd.f32 %v29, %v157
    %159 = vmatmul.bf16.gmra.mxu0 %v69
    %v160 = vpop.f32.mrf.mxu0
    %v161 = vadd.f32 %v29, %v160
    %v162 = vpop.f32.mrf.mxu0
    %v163 = vadd.f32 %v29, %v162
    %164 = vmatmul.bf16.gmra.mxu0 %v72
    %v165 = vpop.f32.mrf.mxu0
    %v166 = vadd.f32 %v29, %v165
    %v167 = vpop.f32.mrf.mxu0
    %v168 = vadd.f32 %v29, %v167
    %169 = vdwg.mxu0
    %170 = vmatpush.bf16.msra.mxu0 0
    %171 = vmatpush.bf16.msra.mxu0 0
    %172 = vmatpush.bf16.msra.mxu0 0
    %173 = vmatpush.bf16.msra.mxu0 0
    %174 = vmatpush.bf16.msra.mxu0 0
    %175 = vmatpush.bf16.msra.mxu0 0
    %176 = vmatpush.bf16.msra.mxu0 0
    %177 = vmatpush.bf16.msra.mxu0 %v81
    %178 = vmatmul.bf16.gmra.mxu0 %v63
    %v179 = vpop.f32.mrf.mxu0
    %v180 = vadd.f32 %v30, %v179
    %v181 = vpop.f32.mrf.mxu0
    %v182 = vadd.f32 %v30, %v181
    %183 = vmatmul.bf16.gmra.mxu0 %v66
    %v184 = vpop.f32.mrf.mxu0
    %v185 = vadd.f32 %v30, %v184
    %v186 = vpop.f32.mrf.mxu0
    %v187 = vadd.f32 %v30, %v186
    %188 = vmatmul.bf16.gmra.mxu0 %v69
    %v189 = vpop.f32.mrf.mxu0
    %v190 = vadd.f32 %v30, %v189
    %v191 = vpop.f32.mrf.mxu0
    %v192 = vadd.f32 %v30, %v191
    %193 = vmatmul.bf16.gmra.mxu0 %v72
    %v194 = vpop.f32.mrf.mxu0
    %v195 = vadd.f32 %v30, %v194
    %v196 = vpop.f32.mrf.mxu0
    %v197 = vadd.f32 %v30, %v196
    %198 = vdwg.mxu0
    %199 = vst [vmem:[#allocation2] sm:$0xff] %v93
    %200 = vst [vmem:[#allocation2 + $0x8] sm:$0xff] %v122
    %201 = vst [vmem:[#allocation2 + $0x10] sm:$0xff] %v151
    %202 = vst [vmem:[#allocation2 + $0x18] sm:$0xff] %v180
    %203 = vst [vmem:[#allocation2 + $0x20] sm:$0xff] %v95
    %204 = vst [vmem:[#allocation2 + $0x28] sm:$0xff] %v124
    %205 = vst [vmem:[#allocation2 + $0x30] sm:$0xff] %v153
    %206 = vst [vmem:[#allocation2 + $0x38] sm:$0xff] %v182
    %207 = vst [vmem:[#allocation2 + $0x40] sm:$0xff] %v98
    %208 = vst [vmem:[#allocation2 + $0x48] sm:$0xff] %v127
    %209 = vst [vmem:[#allocation2 + $0x50] sm:$0xff] %v156
    %210 = vst [vmem:[#allocation2 + $0x58] sm:$0xff] %v185
    %211 = vst [vmem:[#allocation2 + $0x60] sm:$0xff] %v100
    %212 = vst [vmem:[#allocation2 + $0x68] sm:$0xff] %v129
    %213 = vst [vmem:[#allocation2 + $0x70] sm:$0xff] %v158
    %214 = vst [vmem:[#allocation2 + $0x78] sm:$0xff] %v187
    %215 = vst [vmem:[#allocation2 + $0x80] sm:$0xff] %v103
    %216 = vst [vmem:[#allocation2 + $0x88] sm:$0xff] %v132
    %217 = vst [vmem:[#allocation2 + $0x90] sm:$0xff] %v161
    %218 = vst [vmem:[#allocation2 + $0x98] sm:$0xff] %v190
    %219 = vst [vmem:[#allocation2 + $0xa0] sm:$0xff] %v105
    %220 = vst [vmem:[#allocation2 + $0xa8] sm:$0xff] %v134
    %221 = vst [vmem:[#allocation2 + $0xb0] sm:$0xff] %v163
    %222 = vst [vmem:[#allocation2 + $0xb8] sm:$0xff] %v192
    %223 = vst [vmem:[#allocation2 + $0xc0] sm:$0xff] %v108
    %224 = vst [vmem:[#allocation2 + $0xc8] sm:$0xff] %v137
    %225 = vst [vmem:[#allocation2 + $0xd0] sm:$0xff] %v166
    %226 = vst [vmem:[#allocation2 + $0xd8] sm:$0xff] %v195
    %227 = vst [vmem:[#allocation2 + $0xe0] sm:$0xff] %v110
    %228 = vst [vmem:[#allocation2 + $0xe8] sm:$0xff] %v139
    %229 = vst [vmem:[#allocation2 + $0xf0] sm:$0xff] %v168
    %230 = vst [vmem:[#allocation2 + $0xf8] sm:$0xff] %v197
    // Predicated region
    $region14: #{tpu_custom_call.1} parent=1 // pred_check
      _
    $region15: #{tpu_custom_call.1} parent=1 // pred_check_branch
      %232 = sbr.rel (0) target = $region17
    $region16: #{tpu_custom_call.1} parent=1 // pred_region
      %234 = vsyncadd [#allocation3], 0
      %s235 = sshll.u32 [#allocation2], 4
      %s236 = int_to_ptr.vmem [resolvable:$true] %s235
      %s237 = sshll.u32 %s3, 4
      %s238 = int_to_ptr.hbm [resolvable:$true] %s237
      %243 = dma.vmem_to_hbm [thread:$0]  %s236, 4096, %s238, [#allocation3], 512, 512, 32
    $region17: #{tpu_custom_call.1} parent=1 // pred_fallthru
      _
    // Predicated region
    $region18: #{tpu_custom_call.1} parent=1 // pred_check
      _
    $region19: #{tpu_custom_call.1} parent=1 // pred_check_branch
      %245 = sbr.rel (0) target = $region21
    $region20: #{tpu_custom_call.1} parent=1 // pred_region
      %247 = dma.done [#allocation3], 4096
    $region21: #{tpu_custom_call.1} parent=1 // pred_fallthru
      _
    %248 = vsyncpa [#allocation3], 1

</llo_original>
